<compile_context>
chip_gen: v7x
topology: tpu7x:2x2x1
jax: 0.10.0
libtpu: 0.0.40
codegen_flags: <defaults>
</compile_context>

<pallas_src>
import functools

import jax
import jax.numpy as jnp
from jax.experimental import pallas as pl
from jax.experimental.pallas import tpu as pltpu

NUM_PROTEINS = 20
NUM_PROTEINS_MASK = NUM_PROTEINS + 1  # padding_idx for the embedding

_NEG_BIG = -3.0e38
_VMEM_LIMIT = 32 * 1024 * 1024  # safe on v5e / v6e / v7x


def _round_up(x, m):
    return ((x + m - 1) // m) * m


# ----------------------------------------------------------------------------
# Pallas kernels
# ----------------------------------------------------------------------------
def _blin_kernel(x_ref, w_ref, s_ref, b_ref, o_ref, *, relu):
    """y = [relu]((x @ W) * scale + shift) for one (TN, Cin) tile."""
    y = jnp.dot(x_ref[0], w_ref[0], preferred_element_type=jnp.float32)
    y = y * s_ref[...] + b_ref[...]
    if relu:
        y = jnp.maximum(y, 0.0)
    o_ref[0] = y.astype(o_ref.dtype)


def _blin_add_kernel(x_ref, a_ref, w_ref, s_ref, b_ref, o_ref, *, relu):
    """y = [relu](((x + a) @ W) * scale + shift) -- fused residual-style add."""
    t = (x_ref[0].astype(jnp.float32) + a_ref[0].astype(jnp.float32))
    t = t.astype(jnp.bfloat16)
    y = jnp.dot(t, w_ref[0], preferred_element_type=jnp.float32)
    y = y * s_ref[...] + b_ref[...]
    if relu:
        y = jnp.maximum(y, 0.0)
    o_ref[0] = y.astype(o_ref.dtype)


def _chain_max_kernel(x_ref, mask_ref, *args, relus):
    """Apply a chain of (matmul * scale + shift [+ relu]) layers to one point
    tile, then fold a masked max over the point axis into the resident output
    accumulator (reduction over the last grid axis)."""
    o_ref = args[-1]
    nj = pl.program_id(1)

    t = x_ref[0]  # (TN, Cin) bf16
    n_layers = len(relus)
    for li in range(n_layers):
        w = args[3 * li][...]        # (Ci, Co) bf16 (resident)
        s = args[3 * li + 1][...]    # (1, Co) f32
        b = args[3 * li + 2][...]    # (1, Co) f32
        y = jnp.dot(t, w, preferred_element_type=jnp.float32)
        y = y * s + b
        if relus[li]:
            y = jnp.maximum(y, 0.0)
        t = y.astype(jnp.bfloat16) if li + 1 < n_layers else y  # keep last in f32

    m = mask_ref[0]                                   # (TN, 1) f32, 1.0 = valid
    masked = jnp.where(m > 0.5, t, _NEG_BIG)          # (TN, Cout)
    tile_max = jnp.max(masked, axis=0, keepdims=True)  # (1, Cout)

    @pl.when(nj == 0)
    def _init():
        o_ref[...] = jnp.full(o_ref.shape, _NEG_BIG, o_ref.dtype)

    o_ref[...] = jnp.maximum(o_ref[...], tile_max[None].astype(o_ref.dtype))


# ----------------------------------------------------------------------------
# Pallas wrappers
# ----------------------------------------------------------------------------
def batched_linear(x, w, scale, shift, *, relu, tn, add=None,
                   out_dtype=jnp.bfloat16):
    """x: (B, Np, Cin) bf16.  w: (Cin, Cout) shared or (B, Cin, Cout) per-batch
    (used to fold torch.bmm transforms into the following 1x1 conv).
    Optional `add`: (B, Np, Cin) fused into the input before the matmul."""
    B, Np, Cin = x.shape
    per_batch = (w.ndim == 3)
    if not per_batch:
        w = w[None]
    Cout = w.shape[-1]
    n_tiles = Np // tn

    w_idx = (lambda b, n: (b, 0, 0)) if per_batch else (lambda b, n: (0, 0, 0))

    in_specs = [pl.BlockSpec((1, tn, Cin), lambda b, n: (b, n, 0))]
    args = [x]
    if add is not None:
        in_specs.append(pl.BlockSpec((1, tn, Cin), lambda b, n: (b, n, 0)))
        args.append(add)
    in_specs += [
        pl.BlockSpec((1, Cin, Cout), w_idx),
        pl.BlockSpec((1, Cout), lambda b, n: (0, 0)),
        pl.BlockSpec((1, Cout), lambda b, n: (0, 0)),
    ]
    args += [w.astype(jnp.bfloat16),
             scale.astype(jnp.float32).reshape(1, Cout),
             shift.astype(jnp.float32).reshape(1, Cout)]

    kern = functools.partial(
        _blin_add_kernel if add is not None else _blin_kernel, relu=relu)

    bytes_acc = (B * Np * Cin * 2 + int(w.size) * 2 + B * Np * Cout * 2
                 + (B * Np * Cin * 2 if add is not None else 0))
    cost = pl.CostEstimate(flops=2 * B * Np * Cin * Cout,
                           transcendentals=0, bytes_accessed=bytes_acc)

    return pl.pallas_call(
        kern,
        out_shape=jax.ShapeDtypeStruct((B, Np, Cout), out_dtype),
        grid=(B, n_tiles),
        in_specs=in_specs,
        out_specs=pl.BlockSpec((1, tn, Cout), lambda b, n: (b, n, 0)),
        compiler_params=pltpu.CompilerParams(
            dimension_semantics=("parallel", "parallel"),
            vmem_limit_bytes=_VMEM_LIMIT),
        cost_estimate=cost,
    )(*args)


def chain_masked_max(x, mask_f, layers, *, tn, out_dtype=jnp.float32):
    """Fused layer chain + masked max pool over the point axis.
    x: (B, Np, Cin) bf16, mask_f: (B, Np, 1) f32 (1.0 = point participates).
    layers: list of (w (Ci, Co) f32, scale (Co,), shift (Co,), relu: bool).
    Returns (B, Cout_last) f32."""
    B, Np, Cin = x.shape
    n_tiles = Np // tn
    relus = tuple(bool(l[3]) for l in layers)
    cout = layers[-1][0].shape[1]

    in_specs = [
        pl.BlockSpec((1, tn, Cin), lambda b, n: (b, n, 0)),
        pl.BlockSpec((1, tn, 1), lambda b, n: (b, n, 0)),
    ]
    args = [x, mask_f]
    flops = 0
    bytes_acc = B * Np * Cin * 2 + B * Np * 4 + B * cout * 4
    for (w, s, sh, _r) in layers:
        ci, co = w.shape
        in_specs += [
            pl.BlockSpec((ci, co), lambda b, n: (0, 0)),
            pl.BlockSpec((1, co), lambda b, n: (0, 0)),
            pl.BlockSpec((1, co), lambda b, n: (0, 0)),
        ]
        args += [w.astype(jnp.bfloat16),
                 s.astype(jnp.float32).reshape(1, co),
                 sh.astype(jnp.float32).reshape(1, co)]
        flops += 2 * B * Np * ci * co
        bytes_acc += ci * co * 2

    kern = functools.partial(_chain_max_kernel, relus=relus)
    cost = pl.CostEstimate(flops=flops, transcendentals=0,
                           bytes_accessed=bytes_acc)

    out = pl.pallas_call(
        kern,
        out_shape=jax.ShapeDtypeStruct((B, 1, cout), out_dtype),
        grid=(B, n_tiles),
        in_specs=in_specs,
        out_specs=pl.BlockSpec((1, 1, cout), lambda b, n: (b, 0, 0)),
        compiler_params=pltpu.CompilerParams(
            dimension_semantics=("parallel", "arbitrary"),
            vmem_limit_bytes=_VMEM_LIMIT),
        cost_estimate=cost,
    )(*args)
    return out.reshape(B, cout)


# ----------------------------------------------------------------------------
# Tiny XLA helpers (Tnet FC head: shapes are (B, <=512) -> Pallas not worth it)
# ----------------------------------------------------------------------------
def xla_linear(x, w, scale, shift, relu):
    y = x @ w
    y = y * scale + shift
    return jnp.maximum(y, 0.0) if relu else y


# ----------------------------------------------------------------------------
# Deterministic parameter construction (BatchNorm folded, eval mode)
# ----------------------------------------------------------------------------
def init_linear_bn(key, cin, cout, eps=1e-5):
    kw, kb, kg, kbe, km, kv = jax.random.split(key, 6)
    w = 0.1 * jax.random.normal(kw, (cin, cout), jnp.float32)
    b = 0.1 * jax.random.normal(kb, (cout,), jnp.float32)
    gamma = 1.0 + 0.1 * jax.random.normal(kg, (cout,), jnp.float32)
    beta = 0.1 * jax.random.normal(kbe, (cout,), jnp.float32)
    rmean = 0.1 * jax.random.normal(km, (cout,), jnp.float32)
    rvar = jax.random.uniform(kv, (cout,), jnp.float32, 0.5, 1.5)
    scale = gamma / jnp.sqrt(rvar + eps)
    shift = beta - rmean * scale + b * scale  # conv bias folded in as well
    return w, scale, shift


def init_linear(key, cin, cout, wscale=0.01):
    kw, kb = jax.random.split(key, 2)
    w = wscale * jax.random.normal(kw, (cin, cout), jnp.float32)
    b = wscale * jax.random.normal(kb, (cout,), jnp.float32)
    return w, jnp.ones((cout,), jnp.float32), b


def make_tnet_params(key, input_dim, embed=64):
    ks = jax.random.split(key, 6)
    return {
        "c1": init_linear_bn(ks[0], input_dim, embed),
        "c2": init_linear_bn(ks[1], embed, 2 * embed),
        "c3": init_linear_bn(ks[2], 2 * embed, 8 * embed),
        "f1": init_linear_bn(ks[3], 8 * embed, 2 * embed),
        "f2": init_linear_bn(ks[4], 2 * embed, embed),
        # fc3 is zero-initialised in the reference; small values keep the
        # transform path non-trivial while staying close to identity.
        "f3": init_linear(ks[5], embed, input_dim * input_dim),
        "dim": input_dim,
    }


def make_params(key, E):
    ks = jax.random.split(key, 9)
    emb = 0.1 * jax.random.normal(ks[8], (NUM_PROTEINS_MASK + 1, E), jnp.float32)
    emb = emb.at[NUM_PROTEINS_MASK].set(0.0)  # padding_idx row = 0
    return {
        "embed_dim": E,
        "tnet1": make_tnet_params(ks[0], 3),
        "tnet2": make_tnet_params(ks[1], E),
        "conv1": init_linear_bn(ks[2], 3, E),
        "conv_merge": init_linear_bn(ks[3], E, E),
        "conv2": init_linear_bn(ks[4], E, 2 * E),
        "conv3": init_linear_bn(ks[5], 2 * E, 8 * E),
        "head1": init_linear_bn(ks[6], 8 * E, 2 * E),
        "head2": init_linear_bn(ks[7], 2 * E, E),
        "emb_table": emb,
    }


# ----------------------------------------------------------------------------
# Forward pass (channels-last everywhere)
# ----------------------------------------------------------------------------
def tnet_forward(x_bf16, row_valid, p, tn):
    """x_bf16: (B, Np, d) bf16 -> transform matrices (B, d, d) f32.
    conv trunk + (unmasked, as in the reference) max pool is one fused kernel;
    the tiny FC head runs in plain XLA."""
    B, _, d = x_bf16.shape
    g = chain_masked_max(
        x_bf16, row_valid,
        [(*p["c1"], True), (*p["c2"], True), (*p["c3"], True)],
        tn=tn)                                          # (B, 8*embed) f32
    g = xla_linear(g, *p["f1"], True)
    g = xla_linear(g, *p["f2"], True)
    m = xla_linear(g, *p["f3"], False)
    return m.reshape(B, d, d) + jnp.eye(d, dtype=jnp.float32)[None]


def pointnet_encoder_forward(coords, labels, mask, params, *, tn=256):
    """coords: (B, 3, N) (PyTorch NCL), labels: (B, N) int, mask: (B, N) bool."""
    B, _, N = coords.shape
    E = params["embed_dim"]

    # -- pad the point axis to a tile multiple; track real rows separately ----
    tn = min(tn, _round_up(N, 8))
    Np = _round_up(N, tn)

    x_bnc = jnp.transpose(coords, (0, 2, 1)).astype(jnp.float32)  # (B, N, 3)
    if Np != N:
        x_bnc = jnp.pad(x_bnc, ((0, 0), (0, Np - N), (0, 0)))
        labels = jnp.pad(labels, ((0, 0), (0, Np - N)),
                         constant_values=NUM_PROTEINS_MASK)
        mask = jnp.pad(mask, ((0, 0), (0, Np - N)))
    row_valid = (jnp.arange(Np) < N).astype(jnp.float32)
    row_valid = jnp.broadcast_to(row_valid[None, :, None], (B, Np, 1))
    mask_f = mask.astype(jnp.float32).reshape(B, Np, 1)

    x_bf = x_bnc.astype(jnp.bfloat16)

    # -- input transform (Tnet 3x3) ------------------------------------------
    m3 = tnet_forward(x_bf, row_valid, params["tnet1"], tn)       # (B, 3, 3)

    # bmm(x, m3) folded into conv1: per-batch effective weight (B, 3, E)
    w1, s1, b1 = params["conv1"]
    w1_eff = jnp.einsum("bij,jk->bik", m3, w1)
    h = batched_linear(x_bf, w1_eff, s1, b1, relu=True, tn=tn)    # (B, Np, E)

    # -- embedding gather + fused add into conv_merge ------------------------
    emb = jnp.take(params["emb_table"], labels, axis=0).astype(jnp.bfloat16)
    wm, sm, bm = params["conv_merge"]
    h = batched_linear(h, wm, sm, bm, relu=True, tn=tn, add=emb)  # (B, Np, E)

    # -- feature transform (Tnet ExE) -----------------------------------------
    m64 = tnet_forward(h, row_valid, params["tnet2"], tn)         # (B, E, E)

    # bmm(h, m64) folded into conv2: per-batch effective weight (B, E, 2E)
    w2, s2, b2 = params["conv2"]
    w2_eff = jnp.einsum("bij,jk->bik", m64, w2)
    h = batched_linear(h, w2_eff, s2, b2, relu=True, tn=tn)       # (B, Np, 2E)

    # -- fused tail: conv3+bn3+relu -> head1(+relu) -> head2 -> masked max ----
    out = chain_masked_max(
        h, mask_f,
        [(*params["conv3"], True),
         (*params["head1"], True),
         (*params["head2"], False)],
        tn=tn)                                                    # (B, E) f32
    return out


# ----------------------------------------------------------------------------
if __name__ == "__main__":
    key = jax.random.PRNGKey(0)
    kc, kl, km, kp = jax.random.split(key, 4)

    B, N, E = 2, 16, 16
    coords = jax.random.normal(kc, (B, 3, N), jnp.float32)
    labels = jax.random.randint(kl, (B, N), 0, NUM_PROTEINS_MASK + 1)
    mask = jax.random.bernoulli(km, 0.8, (B, N))
    mask = mask.at[:, 0].set(True)  # ensure at least one valid point per item

    params = make_params(kp, E)

    out = pointnet_encoder_forward(coords, labels, mask, params)
    out = jax.block_until_ready(out)
    assert out.shape == (B, E), out.shape
    assert bool(jnp.all(jnp.isfinite(out)))
    print("KERNEL_OK")
</pallas_src>

<mosaic_0001>
module attributes {stable_mosaic.version = 11 : i64} {
  func.func @_chain_max_kernel(%arg0: i32, %arg1: i32, %arg2: memref<1x16x3xbf16, #tpu.memory_space<vmem>>, %arg3: memref<1x16x1xf32, #tpu.memory_space<vmem>>, %arg4: memref<3x64xbf16, #tpu.memory_space<vmem>>, %arg5: memref<1x64xf32, #tpu.memory_space<vmem>>, %arg6: memref<1x64xf32, #tpu.memory_space<vmem>>, %arg7: memref<64x128xbf16, #tpu.memory_space<vmem>>, %arg8: memref<1x128xf32, #tpu.memory_space<vmem>>, %arg9: memref<1x128xf32, #tpu.memory_space<vmem>>, %arg10: memref<128x512xbf16, #tpu.memory_space<vmem>>, %arg11: memref<1x512xf32, #tpu.memory_space<vmem>>, %arg12: memref<1x512xf32, #tpu.memory_space<vmem>>, %arg13: memref<1x1x512xf32, #tpu.memory_space<vmem>>) attributes {dimension_semantics = [#tpu.dimension_semantics<parallel>, #tpu.dimension_semantics<arbitrary>], iteration_bounds = array<i64: 2, 1>, scalar_prefetch = 0 : i64, scratch_operands = 0 : i64, tpu.core_type = #tpu.core_type<tc>, window_params = [{transform_indices = @transform_0, window_bounds = array<i64: 1, 16, 3>}, {transform_indices = @transform_1, window_bounds = array<i64: 1, 16, 1>}, {pipeline_mode = #tpu.pipeline_mode<synchronous>, transform_indices = @transform_2, window_bounds = array<i64: 3, 64>}, {pipeline_mode = #tpu.pipeline_mode<synchronous>, transform_indices = @transform_3, window_bounds = array<i64: 1, 64>}, {pipeline_mode = #tpu.pipeline_mode<synchronous>, transform_indices = @transform_4, window_bounds = array<i64: 1, 64>}, {pipeline_mode = #tpu.pipeline_mode<synchronous>, transform_indices = @transform_5, window_bounds = array<i64: 64, 128>}, {pipeline_mode = #tpu.pipeline_mode<synchronous>, transform_indices = @transform_6, window_bounds = array<i64: 1, 128>}, {pipeline_mode = #tpu.pipeline_mode<synchronous>, transform_indices = @transform_7, window_bounds = array<i64: 1, 128>}, {pipeline_mode = #tpu.pipeline_mode<synchronous>, transform_indices = @transform_8, window_bounds = array<i64: 128, 512>}, {pipeline_mode = #tpu.pipeline_mode<synchronous>, transform_indices = @transform_9, window_bounds = array<i64: 1, 512>}, {pipeline_mode = #tpu.pipeline_mode<synchronous>, transform_indices = @transform_10, window_bounds = array<i64: 1, 512>}, {transform_indices = @transform_11, window_bounds = array<i64: 1, 1, 512>}]} {
    %c0 = arith.constant 0 : index
    %c0_0 = arith.constant 0 : index
    %c0_1 = arith.constant 0 : index
    %0 = vector.load %arg2[%c0, %c0_0, %c0_1] : memref<1x16x3xbf16, #tpu.memory_space<vmem>>, vector<1x16x3xbf16>
    %1 = vector.shape_cast %0 : vector<1x16x3xbf16> to vector<16x3xbf16>
    %c0_2 = arith.constant 0 : index
    %c0_3 = arith.constant 0 : index
    %2 = vector.load %arg4[%c0_2, %c0_3] : memref<3x64xbf16, #tpu.memory_space<vmem>>, vector<3x64xbf16>
    %c0_4 = arith.constant 0 : index
    %c0_5 = arith.constant 0 : index
    %3 = vector.load %arg5[%c0_4, %c0_5] : memref<1x64xf32, #tpu.memory_space<vmem>>, vector<1x64xf32>
    %c0_6 = arith.constant 0 : index
    %c0_7 = arith.constant 0 : index
    %4 = vector.load %arg6[%c0_6, %c0_7] : memref<1x64xf32, #tpu.memory_space<vmem>>, vector<1x64xf32>
    %cst = arith.constant dense<0.000000e+00> : vector<16x64xf32>
    %5 = tpu.matmul %1, %2, %cst {dimension_numbers = #tpu.dot_dimension_numbers<[1], [0], [0], [1], [0, 0, 1, 1], [], []>} : vector<16x3xbf16>, vector<3x64xbf16>, vector<16x64xf32> -> vector<16x64xf32>
    %6 = vector.broadcast %3 : vector<1x64xf32> to vector<16x64xf32>
    %7 = arith.mulf %5, %6 : vector<16x64xf32>
    %8 = vector.broadcast %4 : vector<1x64xf32> to vector<16x64xf32>
    %9 = arith.addf %7, %8 : vector<16x64xf32>
    %cst_8 = arith.constant 0.000000e+00 : f32
    %10 = vector.broadcast %cst_8 : f32 to vector<16x64xf32>
    %11 = arith.maximumf %9, %10 : vector<16x64xf32>
    %12 = arith.truncf %11 : vector<16x64xf32> to vector<16x64xbf16>
    %c0_9 = arith.constant 0 : index
    %c0_10 = arith.constant 0 : index
    %13 = vector.load %arg7[%c0_9, %c0_10] : memref<64x128xbf16, #tpu.memory_space<vmem>>, vector<64x128xbf16>
    %c0_11 = arith.constant 0 : index
    %c0_12 = arith.constant 0 : index
    %14 = vector.load %arg8[%c0_11, %c0_12] : memref<1x128xf32, #tpu.memory_space<vmem>>, vector<1x128xf32>
    %c0_13 = arith.constant 0 : index
    %c0_14 = arith.constant 0 : index
    %15 = vector.load %arg9[%c0_13, %c0_14] : memref<1x128xf32, #tpu.memory_space<vmem>>, vector<1x128xf32>
    %cst_15 = arith.constant dense<0.000000e+00> : vector<16x128xf32>
    %16 = tpu.matmul %12, %13, %cst_15 {dimension_numbers = #tpu.dot_dimension_numbers<[1], [0], [0], [1], [0, 0, 1, 1], [], []>} : vector<16x64xbf16>, vector<64x128xbf16>, vector<16x128xf32> -> vector<16x128xf32>
    %17 = vector.broadcast %14 : vector<1x128xf32> to vector<16x128xf32>
    %18 = arith.mulf %16, %17 : vector<16x128xf32>
    %19 = vector.broadcast %15 : vector<1x128xf32> to vector<16x128xf32>
    %20 = arith.addf %18, %19 : vector<16x128xf32>
    %cst_16 = arith.constant 0.000000e+00 : f32
    %21 = vector.broadcast %cst_16 : f32 to vector<16x128xf32>
    %22 = arith.maximumf %20, %21 : vector<16x128xf32>
    %23 = arith.truncf %22 : vector<16x128xf32> to vector<16x128xbf16>
    %c0_17 = arith.constant 0 : index
    %c0_18 = arith.constant 0 : index
    %24 = vector.load %arg10[%c0_17, %c0_18] : memref<128x512xbf16, #tpu.memory_space<vmem>>, vector<128x512xbf16>
    %c0_19 = arith.constant 0 : index
    %c0_20 = arith.constant 0 : index
    %25 = vector.load %arg11[%c0_19, %c0_20] : memref<1x512xf32, #tpu.memory_space<vmem>>, vector<1x512xf32>
    %c0_21 = arith.constant 0 : index
    %c0_22 = arith.constant 0 : index
    %26 = vector.load %arg12[%c0_21, %c0_22] : memref<1x512xf32, #tpu.memory_space<vmem>>, vector<1x512xf32>
    %cst_23 = arith.constant dense<0.000000e+00> : vector<16x512xf32>
    %27 = tpu.matmul %23, %24, %cst_23 {dimension_numbers = #tpu.dot_dimension_numbers<[1], [0], [0], [1], [0, 0, 1, 1], [], []>} : vector<16x128xbf16>, vector<128x512xbf16>, vector<16x512xf32> -> vector<16x512xf32>
    %28 = vector.broadcast %25 : vector<1x512xf32> to vector<16x512xf32>
    %29 = arith.mulf %27, %28 : vector<16x512xf32>
    %30 = vector.broadcast %26 : vector<1x512xf32> to vector<16x512xf32>
    %31 = arith.addf %29, %30 : vector<16x512xf32>
    %cst_24 = arith.constant 0.000000e+00 : f32
    %32 = vector.broadcast %cst_24 : f32 to vector<16x512xf32>
    %33 = arith.maximumf %31, %32 : vector<16x512xf32>
    %c0_25 = arith.constant 0 : index
    %c0_26 = arith.constant 0 : index
    %c0_27 = arith.constant 0 : index
    %34 = vector.load %arg3[%c0_25, %c0_26, %c0_27] : memref<1x16x1xf32, #tpu.memory_space<vmem>>, vector<1x16x1xf32>
    %35 = vector.shape_cast %34 : vector<1x16x1xf32> to vector<16x1xf32>
    %cst_28 = arith.constant 5.000000e-01 : f32
    %36 = vector.broadcast %cst_28 : f32 to vector<16x1xf32>
    %37 = arith.cmpf ogt, %35, %36 : vector<16x1xf32>
    %cst_29 = arith.constant -3.000000e+38 : f32
    %38 = vector.shape_cast %37 : vector<16x1xi1> to vector<16x1xi1>
    %39 = vector.broadcast %38 : vector<16x1xi1> to vector<16x512xi1>
    %40 = vector.broadcast %cst_29 : f32 to vector<16x512xf32>
    %41 = arith.select %39, %33, %40 : vector<16x512xi1>, vector<16x512xf32>
    %cst_30 = arith.constant dense<0xFF800000> : vector<512xf32>
    %42 = vector.multi_reduction <maximumf>, %41, %cst_30 [0] : vector<16x512xf32> to vector<512xf32>
    %43 = vector.shape_cast %42 : vector<512xf32> to vector<1x512xf32>
    %c0_i32 = arith.constant 0 : i32
    %44 = arith.cmpi eq, %arg1, %c0_i32 : i32
    %45 = arith.extui %44 : i1 to i32
    %c0_i32_31 = arith.constant 0 : i32
    %46 = arith.cmpi ne, %45, %c0_i32_31 : i32
    scf.if %46 {
      %cst_38 = arith.constant -3.000000e+38 : f32
      %51 = vector.broadcast %cst_38 : f32 to vector<1x1x512xf32>
      %c0_39 = arith.constant 0 : index
      %c0_40 = arith.constant 0 : index
      %c0_41 = arith.constant 0 : index
      %52 = vector.load %arg13[%c0_39, %c0_40, %c0_41] : memref<1x1x512xf32, #tpu.memory_space<vmem>>, vector<1x1x512xf32>
      tpu.vector_store %arg13[%c0_39, %c0_40, %c0_41], %51 {strides = array<i32>} : memref<1x1x512xf32, #tpu.memory_space<vmem>>, vector<1x1x512xf32>,
    } else {
    }
    %c0_32 = arith.constant 0 : index
    %c0_33 = arith.constant 0 : index
    %c0_34 = arith.constant 0 : index
    %47 = vector.load %arg13[%c0_32, %c0_33, %c0_34] : memref<1x1x512xf32, #tpu.memory_space<vmem>>, vector<1x1x512xf32>
    %48 = vector.shape_cast %43 : vector<1x512xf32> to vector<1x1x512xf32>
    %49 = arith.maximumf %47, %48 : vector<1x1x512xf32>
    %c0_35 = arith.constant 0 : index
    %c0_36 = arith.constant 0 : index
    %c0_37 = arith.constant 0 : index
    %50 = vector.load %arg13[%c0_35, %c0_36, %c0_37] : memref<1x1x512xf32, #tpu.memory_space<vmem>>, vector<1x1x512xf32>
    tpu.vector_store %arg13[%c0_35, %c0_36, %c0_37], %49 {strides = array<i32>} : memref<1x1x512xf32, #tpu.memory_space<vmem>>, vector<1x1x512xf32>,
    return
  }
  func.func @transform_0(%arg0: i32, %arg1: i32) -> (i32, i32, i32) {
    %c0_i32 = arith.constant 0 : i32
    %c0_i32_0 = arith.constant 0 : i32
    return %arg0, %arg1, %c0_i32 : i32, i32, i32
  }
  func.func @transform_1(%arg0: i32, %arg1: i32) -> (i32, i32, i32) {
    %c0_i32 = arith.constant 0 : i32
    %c0_i32_0 = arith.constant 0 : i32
    return %arg0, %arg1, %c0_i32 : i32, i32, i32
  }
  func.func @transform_2(%arg0: i32, %arg1: i32) -> (i32, i32) {
    %c0_i32 = arith.constant 0 : i32
    %c0_i32_0 = arith.constant 0 : i32
    %c0_i32_1 = arith.constant 0 : i32
    return %c0_i32, %c0_i32_0 : i32, i32
  }
  func.func @transform_3(%arg0: i32, %arg1: i32) -> (i32, i32) {
    %c0_i32 = arith.constant 0 : i32
    %c0_i32_0 = arith.constant 0 : i32
    %c0_i32_1 = arith.constant 0 : i32
    return %c0_i32, %c0_i32_0 : i32, i32
  }
  func.func @transform_4(%arg0: i32, %arg1: i32) -> (i32, i32) {
    %c0_i32 = arith.constant 0 : i32
    %c0_i32_0 = arith.constant 0 : i32
    %c0_i32_1 = arith.constant 0 : i32
    return %c0_i32, %c0_i32_0 : i32, i32
  }
  func.func @transform_5(%arg0: i32, %arg1: i32) -> (i32, i32) {
    %c0_i32 = arith.constant 0 : i32
    %c0_i32_0 = arith.constant 0 : i32
    %c0_i32_1 = arith.constant 0 : i32
    return %c0_i32, %c0_i32_0 : i32, i32
  }
  func.func @transform_6(%arg0: i32, %arg1: i32) -> (i32, i32) {
    %c0_i32 = arith.constant 0 : i32
    %c0_i32_0 = arith.constant 0 : i32
    %c0_i32_1 = arith.constant 0 : i32
    return %c0_i32, %c0_i32_0 : i32, i32
  }
  func.func @transform_7(%arg0: i32, %arg1: i32) -> (i32, i32) {
    %c0_i32 = arith.constant 0 : i32
    %c0_i32_0 = arith.constant 0 : i32
    %c0_i32_1 = arith.constant 0 : i32
    return %c0_i32, %c0_i32_0 : i32, i32
  }
  func.func @transform_8(%arg0: i32, %arg1: i32) -> (i32, i32) {
    %c0_i32 = arith.constant 0 : i32
    %c0_i32_0 = arith.constant 0 : i32
    %c0_i32_1 = arith.constant 0 : i32
    return %c0_i32, %c0_i32_0 : i32, i32
  }
  func.func @transform_9(%arg0: i32, %arg1: i32) -> (i32, i32) {
    %c0_i32 = arith.constant 0 : i32
    %c0_i32_0 = arith.constant 0 : i32
    %c0_i32_1 = arith.constant 0 : i32
    return %c0_i32, %c0_i32_0 : i32, i32
  }
  func.func @transform_10(%arg0: i32, %arg1: i32) -> (i32, i32) {
    %c0_i32 = arith.constant 0 : i32
    %c0_i32_0 = arith.constant 0 : i32
    %c0_i32_1 = arith.constant 0 : i32
    return %c0_i32, %c0_i32_0 : i32, i32
  }
  func.func @transform_11(%arg0: i32, %arg1: i32) -> (i32, i32, i32) {
    %c0_i32 = arith.constant 0 : i32
    %c0_i32_0 = arith.constant 0 : i32
    %c0_i32_1 = arith.constant 0 : i32
    return %arg0, %c0_i32, %c0_i32_0 : i32, i32, i32
  }
}

</mosaic_0001>

<llo_original>
// kernel: tpu_custom_call.1
$region0: #{tpu_custom_call.1}
  #allocation0 [shape = 'u32[]', space=smem, size = 0x4, offset = 0x4, fixed_abs, tag = 'smem constant byte address 0x4 - core index']
  #allocation1 [shape = 'u32[144,128]{1,0:T(1,128)}', space=vmem, size = 0x12000, scoped, tag = 'internal scratch']
  %s0 = inlined_call_operand.vmem [shape: bf16[2,16,3], index: 0, kind: input, shape index: {}]
  %s1 = inlined_call_operand.vmem [shape: f32[2,16,1], index: 1, kind: input, shape index: {}]
  %s2 = inlined_call_operand.vmem [shape: bf16[3,64], index: 2, kind: input, shape index: {}]
  %s3 = inlined_call_operand.vmem [shape: f32[1,64], index: 3, kind: input, shape index: {}]
  %s4 = inlined_call_operand.vmem [shape: f32[1,64], index: 4, kind: input, shape index: {}]
  %s5 = inlined_call_operand.vmem [shape: bf16[64,128], index: 5, kind: input, shape index: {}]
  %s6 = inlined_call_operand.vmem [shape: f32[1,128], index: 6, kind: input, shape index: {}]
  %s7 = inlined_call_operand.vmem [shape: f32[1,128], index: 7, kind: input, shape index: {}]
  %s8 = inlined_call_operand.hbm [shape: bf16[128,512], index: 8, kind: input, shape index: {}]
  %s9 = inlined_call_operand.vmem [shape: f32[1,512], index: 9, kind: input, shape index: {}]
  %s10 = inlined_call_operand.vmem [shape: f32[1,512], index: 10, kind: input, shape index: {}]
  %s11 = inlined_call_operand.hbm [shape: f32[2,1,512], index: 11, kind: output, shape index: {}]
  %s12 = sld [smem:[#allocation0]]
  $region85: #{tpu_custom_call.1} parent=0
    _
  %s14 = ssub.s32 1, %s12
  %s15 = scalar_select 0, %s14, %s12
  $region1: #{tpu_custom_call.1} parent=0
    #allocation2 [shape = 'u8[131072]{0}', space=vmem, size = 0x20000, scoped, tag = 'input window, operand 8, single buffered']
    #allocation3 [shape = 's32[2]{0}', space=sflag, size = 0x8, scoped, tag = 'scoped memory for tpu_custom_call.1']
    #allocation4 [shape = 's32[2]{0}', space=sflag, size = 0x8, scoped, tag = 'scoped memory for tpu_custom_call.1']
    #allocation5 [shape = 'u8[4096]{0}', space=vmem, size = 0x1000, scoped, tag = 'output window, operand 0']
    %16 = vsyncpa [#allocation3], 0
    %17 = vsyncpa [#allocation4], 0
    %s18 = scalar_lea.sflag [#allocation4], 1
    %19 = vsyncpa %s18, 0
    loop: start=0, step=1, limit=4
    $region2: #{tpu_custom_call.1} parent=1 // loop_pre_header
      _
    $region3: #{tpu_custom_call.1} parent=1 // loop_header
      %s21 = sphi 0, %s25
      %p22 = scmp.ge.s32.totalorder %s21, 4
      %s28 = sphi 0, %s40
      %s29 = sphi 0, %s36
      %s30 = sphi 0, %s28
      %s31 = sphi 0, %s29
      %s32 = sphi 0, %s30
      %s33 = sphi 0, %s31
      %s45 = sphi 0, %s47
      %s48 = sphi 0, %s45
      %s49 = sphi 0, %s48
      %s65 = sphi 0, %s49
      %s73 = sphi 0, %s75
      %s76 = sphi 0, %s73
      %s77 = sphi 0, %s76
      %s93 = sphi 0, %s77
      %s97 = sphi 0, %s97
      %s99 = sphi 0, %s97
      %s100 = sphi 0, %s99
      %s114 = sphi 0, %s100
      %s118 = sphi 0, %s118
      %s120 = sphi 0, %s118
      %s121 = sphi 0, %s120
      %s135 = sphi 0, %s121
      %s139 = sphi 0, %s139
      %s141 = sphi 0, %s139
      %s142 = sphi 0, %s141
      %s156 = sphi 0, %s142
      %s160 = sphi 0, %s160
      %s162 = sphi 0, %s160
      %s163 = sphi 0, %s162
      %s177 = sphi 0, %s163
      %s181 = sphi 0, %s181
      %s183 = sphi 0, %s181
      %s184 = sphi 0, %s183
      %s198 = sphi 0, %s184
      %s202 = sphi 0, %s202
      %s204 = sphi 0, %s202
      %s205 = sphi 0, %s204
      %s219 = sphi 0, %s205
      %s223 = sphi 0, %s223
      %s225 = sphi 0, %s223
      %s226 = sphi 0, %s225
      %s240 = sphi 0, %s226
      %s244 = sphi 0, %s244
      %s246 = sphi 0, %s244
      %s247 = sphi 0, %s246
      %s261 = sphi 0, %s247
      %s265 = sphi 0, %s265
      %s267 = sphi 0, %s265
      %s268 = sphi 0, %s267
      %s282 = sphi 0, %s268
      %s288 = sphi 0, %s290
      %s291 = sphi 0, %s288
      %s292 = sphi 0, %s291
      %s308 = sphi 0, %s292
    $region4: #{tpu_custom_call.1} parent=1 // loop_header_branch
      %24 = sbr.rel (%p22) target = $region8
    $region5: #{tpu_custom_call.1} parent=1 // loop_body
      %s26 = ssub.s32 %s21, 1
      %s27 = ssub.s32 %s21, 2
      %s34 = sadd.s32 1, %s29
      %p35 = scmp.ge.s32.totalorder %s34, 1
      %s36 = scalar_select %p35, 0, %s34
      %s37 = sadd.s32 1, %s28
      %s38 = scalar_select %p35, %s37, %s28
      %p39 = scmp.ge.s32.totalorder %s38, 2
      %s40 = scalar_select %p39, 0, %s38
      %s41 = ssub.s32 %s28, %s40
      %s42 = ssub.s32 %s29, %s36
      %s43 = sor.u32 %s41, %s42
      %p44 = scmp.eq.s32.totalorder %s43, 0
      %s46 = sadd.s32 %s45, 1
      %s47 = scalar_select %p44, %s45, %s46
      %p50 = pneg %p44
      %p51 = scmp.eq.s32.totalorder %s21, 1
      %p52 = por %p50, %p51
      %p53 = scmp.ne.s32.totalorder %s45, %s48
      %p54 = scmp.eq.s32.totalorder %s21, 0
      %p55 = por %p53, %p54
      %p56 = scmp.ne.s32.totalorder %s45, %s48
      %p57 = scmp.eq.s32.totalorder %s26, 1
      %p58 = por %p56, %p57
      %p59 = scmp.ne.s32.totalorder %s48, %s49
      %p60 = scmp.eq.s32.totalorder %s26, 0
      %p61 = por %p59, %p60
      %p62 = scmp.ne.s32.totalorder %s48, %s49
      %p63 = scmp.eq.s32.totalorder %s27, 1
      %p64 = por %p62, %p63
      %p66 = scmp.ne.s32.totalorder %s49, %s65
      %p67 = scmp.eq.s32.totalorder %s27, 0
      %p68 = por %p66, %p67
      %s69 = ssub.s32 %s28, %s40
      %s70 = ssub.s32 %s29, %s36
      %s71 = sor.u32 %s69, %s70
      %p72 = scmp.eq.s32.totalorder %s71, 0
      %s74 = sadd.s32 %s73, 1
      %s75 = scalar_select %p72, %s73, %s74
      %p78 = pneg %p72
      %p79 = scmp.eq.s32.totalorder %s21, 1
      %p80 = por %p78, %p79
      %p81 = scmp.ne.s32.totalorder %s73, %s76
      %p82 = scmp.eq.s32.totalorder %s21, 0
      %p83 = por %p81, %p82
      %p84 = scmp.ne.s32.totalorder %s73, %s76
      %p85 = scmp.eq.s32.totalorder %s26, 1
      %p86 = por %p84, %p85
      %p87 = scmp.ne.s32.totalorder %s76, %s77
      %p88 = scmp.eq.s32.totalorder %s26, 0
      %p89 = por %p87, %p88
      %p90 = scmp.ne.s32.totalorder %s76, %s77
      %p91 = scmp.eq.s32.totalorder %s27, 1
      %p92 = por %p90, %p91
      %p94 = scmp.ne.s32.totalorder %s77, %s93
      %p95 = scmp.eq.s32.totalorder %s27, 0
      %p96 = por %p94, %p95
      %s98 = sadd.s32 %s97, 1
      %p101 = scmp.eq.s32.totalorder %s21, 1
      %p102 = scmp.ne.s32.totalorder %s97, %s99
      %p103 = scmp.eq.s32.totalorder %s21, 0
      %p104 = por %p102, %p103
      %p105 = scmp.ne.s32.totalorder %s97, %s99
      %p106 = scmp.eq.s32.totalorder %s26, 1
      %p107 = por %p105, %p106
      %p108 = scmp.ne.s32.totalorder %s99, %s100
      %p109 = scmp.eq.s32.totalorder %s26, 0
      %p110 = por %p108, %p109
      %p111 = scmp.ne.s32.totalorder %s99, %s100
      %p112 = scmp.eq.s32.totalorder %s27, 1
      %p113 = por %p111, %p112
      %p115 = scmp.ne.s32.totalorder %s100, %s114
      %p116 = scmp.eq.s32.totalorder %s27, 0
      %p117 = por %p115, %p116
      %s119 = sadd.s32 %s118, 1
      %p122 = scmp.eq.s32.totalorder %s21, 1
      %p123 = scmp.ne.s32.totalorder %s118, %s120
      %p124 = scmp.eq.s32.totalorder %s21, 0
      %p125 = por %p123, %p124
      %p126 = scmp.ne.s32.totalorder %s118, %s120
      %p127 = scmp.eq.s32.totalorder %s26, 1
      %p128 = por %p126, %p127
      %p129 = scmp.ne.s32.totalorder %s120, %s121
      %p130 = scmp.eq.s32.totalorder %s26, 0
      %p131 = por %p129, %p130
      %p132 = scmp.ne.s32.totalorder %s120, %s121
      %p133 = scmp.eq.s32.totalorder %s27, 1
      %p134 = por %p132, %p133
      %p136 = scmp.ne.s32.totalorder %s121, %s135
      %p137 = scmp.eq.s32.totalorder %s27, 0
      %p138 = por %p136, %p137
      %s140 = sadd.s32 %s139, 1
      %p143 = scmp.eq.s32.totalorder %s21, 1
      %p144 = scmp.ne.s32.totalorder %s139, %s141
      %p145 = scmp.eq.s32.totalorder %s21, 0
      %p146 = por %p144, %p145
      %p147 = scmp.ne.s32.totalorder %s139, %s141
      %p148 = scmp.eq.s32.totalorder %s26, 1
      %p149 = por %p147, %p148
      %p150 = scmp.ne.s32.totalorder %s141, %s142
      %p151 = scmp.eq.s32.totalorder %s26, 0
      %p152 = por %p150, %p151
      %p153 = scmp.ne.s32.totalorder %s141, %s142
      %p154 = scmp.eq.s32.totalorder %s27, 1
      %p155 = por %p153, %p154
      %p157 = scmp.ne.s32.totalorder %s142, %s156
      %p158 = scmp.eq.s32.totalorder %s27, 0
      %p159 = por %p157, %p158
      %s161 = sadd.s32 %s160, 1
      %p164 = scmp.eq.s32.totalorder %s21, 1
      %p165 = scmp.ne.s32.totalorder %s160, %s162
      %p166 = scmp.eq.s32.totalorder %s21, 0
      %p167 = por %p165, %p166
      %p168 = scmp.ne.s32.totalorder %s160, %s162
      %p169 = scmp.eq.s32.totalorder %s26, 1
      %p170 = por %p168, %p169
      %p171 = scmp.ne.s32.totalorder %s162, %s163
      %p172 = scmp.eq.s32.totalorder %s26, 0
      %p173 = por %p171, %p172
      %p174 = scmp.ne.s32.totalorder %s162, %s163
      %p175 = scmp.eq.s32.totalorder %s27, 1
      %p176 = por %p174, %p175
      %p178 = scmp.ne.s32.totalorder %s163, %s177
      %p179 = scmp.eq.s32.totalorder %s27, 0
      %p180 = por %p178, %p179
      %s182 = sadd.s32 %s181, 1
      %p185 = scmp.eq.s32.totalorder %s21, 1
      %p186 = scmp.ne.s32.totalorder %s181, %s183
      %p187 = scmp.eq.s32.totalorder %s21, 0
      %p188 = por %p186, %p187
      %p189 = scmp.ne.s32.totalorder %s181, %s183
      %p190 = scmp.eq.s32.totalorder %s26, 1
      %p191 = por %p189, %p190
      %p192 = scmp.ne.s32.totalorder %s183, %s184
      %p193 = scmp.eq.s32.totalorder %s26, 0
      %p194 = por %p192, %p193
      %p195 = scmp.ne.s32.totalorder %s183, %s184
      %p196 = scmp.eq.s32.totalorder %s27, 1
      %p197 = por %p195, %p196
      %p199 = scmp.ne.s32.totalorder %s184, %s198
      %p200 = scmp.eq.s32.totalorder %s27, 0
      %p201 = por %p199, %p200
      %s203 = sadd.s32 %s202, 1
      %p206 = scmp.eq.s32.totalorder %s21, 1
      %p207 = scmp.ne.s32.totalorder %s202, %s204
      %p208 = scmp.eq.s32.totalorder %s21, 0
      %p209 = por %p207, %p208
      %p210 = scmp.ne.s32.totalorder %s202, %s204
      %p211 = scmp.eq.s32.totalorder %s26, 1
      %p212 = por %p210, %p211
      %p213 = scmp.ne.s32.totalorder %s204, %s205
      %p214 = scmp.eq.s32.totalorder %s26, 0
      %p215 = por %p213, %p214
      %p216 = scmp.ne.s32.totalorder %s204, %s205
      %p217 = scmp.eq.s32.totalorder %s27, 1
      %p218 = por %p216, %p217
      %p220 = scmp.ne.s32.totalorder %s205, %s219
      %p221 = scmp.eq.s32.totalorder %s27, 0
      %p222 = por %p220, %p221
      %s224 = sadd.s32 %s223, 1
      %p227 = scmp.eq.s32.totalorder %s21, 1
      %p228 = scmp.ne.s32.totalorder %s223, %s225
      %p229 = scmp.eq.s32.totalorder %s21, 0
      %p230 = por %p228, %p229
      %p231 = scmp.ne.s32.totalorder %s223, %s225
      %p232 = scmp.eq.s32.totalorder %s26, 1
      %p233 = por %p231, %p232
      %p234 = scmp.ne.s32.totalorder %s225, %s226
      %p235 = scmp.eq.s32.totalorder %s26, 0
      %p236 = por %p234, %p235
      %p237 = scmp.ne.s32.totalorder %s225, %s226
      %p238 = scmp.eq.s32.totalorder %s27, 1
      %p239 = por %p237, %p238
      %p241 = scmp.ne.s32.totalorder %s226, %s240
      %p242 = scmp.eq.s32.totalorder %s27, 0
      %p243 = por %p241, %p242
      %s245 = sadd.s32 %s244, 1
      %p248 = scmp.eq.s32.totalorder %s21, 1
      %p249 = scmp.ne.s32.totalorder %s244, %s246
      %p250 = scmp.eq.s32.totalorder %s21, 0
      %p251 = por %p249, %p250
      %p252 = scmp.ne.s32.totalorder %s244, %s246
      %p253 = scmp.eq.s32.totalorder %s26, 1
      %p254 = por %p252, %p253
      %p255 = scmp.ne.s32.totalorder %s246, %s247
      %p256 = scmp.eq.s32.totalorder %s26, 0
      %p257 = por %p255, %p256
      %p258 = scmp.ne.s32.totalorder %s246, %s247
      %p259 = scmp.eq.s32.totalorder %s27, 1
      %p260 = por %p258, %p259
      %p262 = scmp.ne.s32.totalorder %s247, %s261
      %p263 = scmp.eq.s32.totalorder %s27, 0
      %p264 = por %p262, %p263
      %s266 = sadd.s32 %s265, 1
      %p269 = scmp.eq.s32.totalorder %s21, 1
      %p270 = scmp.ne.s32.totalorder %s265, %s267
      %p271 = scmp.eq.s32.totalorder %s21, 0
      %p272 = por %p270, %p271
      %p273 = scmp.ne.s32.totalorder %s265, %s267
      %p274 = scmp.eq.s32.totalorder %s26, 1
      %p275 = por %p273, %p274
      %p276 = scmp.ne.s32.totalorder %s267, %s268
      %p277 = scmp.eq.s32.totalorder %s26, 0
      %p278 = por %p276, %p277
      %p279 = scmp.ne.s32.totalorder %s267, %s268
      %p280 = scmp.eq.s32.totalorder %s27, 1
      %p281 = por %p279, %p280
      %p283 = scmp.ne.s32.totalorder %s268, %s282
      %p284 = scmp.eq.s32.totalorder %s27, 0
      %p285 = por %p283, %p284
      %s286 = ssub.s32 %s28, %s40
      %p287 = scmp.eq.s32.totalorder %s286, 0
      %s289 = sadd.s32 %s288, 1
      %s290 = scalar_select %p287, %s288, %s289
      %p293 = pneg %p287
      %p294 = scmp.eq.s32.totalorder %s21, 1
      %p295 = por %p293, %p294
      %p296 = scmp.ne.s32.totalorder %s288, %s291
      %p297 = scmp.eq.s32.totalorder %s21, 0
      %p298 = por %p296, %p297
      %p299 = scmp.ne.s32.totalorder %s288, %s291
      %p300 = scmp.eq.s32.totalorder %s26, 1
      %p301 = por %p299, %p300
      %p302 = scmp.ne.s32.totalorder %s291, %s292
      %p303 = scmp.eq.s32.totalorder %s26, 0
      %p304 = por %p302, %p303
      %p305 = scmp.ne.s32.totalorder %s291, %s292
      %p306 = scmp.eq.s32.totalorder %s27, 1
      %p307 = por %p305, %p306
      %p309 = scmp.ne.s32.totalorder %s292, %s308
      %p310 = scmp.eq.s32.totalorder %s27, 0
      %p311 = por %p309, %p310
      %p312 = scmp.le.s32.totalorder 1, %s21
      %p313 = scmp.lt.s32.totalorder %s21, 3
      %p314 = pnand %p312, %p313
      %p315 = pneg %p314
      // Predicated region
      $region9: #{tpu_custom_call.1} parent=5 // pred_check
        _
      $region10: #{tpu_custom_call.1} parent=5 // pred_check_branch
        %317 = sbr.rel (%p314) target = $region12
      $region11: #{tpu_custom_call.1} parent=5 // pred_region
        %s318 = ssub.s32 %s21, 1
        // Predicated region
        $region13: #{tpu_custom_call.1} parent=11 // pred_check
          %p319 = pneg %p110
        $region14: #{tpu_custom_call.1} parent=11 // pred_check_branch
          %321 = sbr.rel (%p319) target = $region16
        $region15: #{tpu_custom_call.1} parent=11 // pred_region
          _
        $region16: #{tpu_custom_call.1} parent=11 // pred_fallthru
          _
        // Predicated region
        $region17: #{tpu_custom_call.1} parent=11 // pred_check
          %p322 = pneg %p131
        $region18: #{tpu_custom_call.1} parent=11 // pred_check_branch
          %324 = sbr.rel (%p322) target = $region20
        $region19: #{tpu_custom_call.1} parent=11 // pred_region
          _
        $region20: #{tpu_custom_call.1} parent=11 // pred_fallthru
          _
        // Predicated region
        $region21: #{tpu_custom_call.1} parent=11 // pred_check
          %p325 = pneg %p152
        $region22: #{tpu_custom_call.1} parent=11 // pred_check_branch
          %327 = sbr.rel (%p325) target = $region24
        $region23: #{tpu_custom_call.1} parent=11 // pred_region
          _
        $region24: #{tpu_custom_call.1} parent=11 // pred_fallthru
          _
        // Predicated region
        $region25: #{tpu_custom_call.1} parent=11 // pred_check
          %p328 = pneg %p173
        $region26: #{tpu_custom_call.1} parent=11 // pred_check_branch
          %330 = sbr.rel (%p328) target = $region28
        $region27: #{tpu_custom_call.1} parent=11 // pred_region
          _
        $region28: #{tpu_custom_call.1} parent=11 // pred_fallthru
          _
        // Predicated region
        $region29: #{tpu_custom_call.1} parent=11 // pred_check
          %p331 = pneg %p194
        $region30: #{tpu_custom_call.1} parent=11 // pred_check_branch
          %333 = sbr.rel (%p331) target = $region32
        $region31: #{tpu_custom_call.1} parent=11 // pred_region
          _
        $region32: #{tpu_custom_call.1} parent=11 // pred_fallthru
          _
        // Predicated region
        $region33: #{tpu_custom_call.1} parent=11 // pred_check
          %p334 = pneg %p215
        $region34: #{tpu_custom_call.1} parent=11 // pred_check_branch
          %336 = sbr.rel (%p334) target = $region36
        $region35: #{tpu_custom_call.1} parent=11 // pred_region
          _
        $region36: #{tpu_custom_call.1} parent=11 // pred_fallthru
          _
        // Predicated region
        $region37: #{tpu_custom_call.1} parent=11 // pred_check
          %p337 = pneg %p236
        $region38: #{tpu_custom_call.1} parent=11 // pred_check_branch
          %339 = sbr.rel (%p337) target = $region40
        $region39: #{tpu_custom_call.1} parent=11 // pred_region
          %s341 = ssub.s32 4096, 4096
          %342 = vsyncadd [#allocation3], %s341
          %s343 = sshll.u32 [#allocation2], 4
          %s344 = int_to_ptr.vmem [resolvable:$true] %s343
          %349 = dma.hbm_to_vmem [thread:$0]  %s8, 4096, %s344, [#allocation3], 256, 256, 16
        $region40: #{tpu_custom_call.1} parent=11 // pred_fallthru
          _
        // Predicated region
        $region41: #{tpu_custom_call.1} parent=11 // pred_check
          %p350 = pneg %p257
        $region42: #{tpu_custom_call.1} parent=11 // pred_check_branch
          %352 = sbr.rel (%p350) target = $region44
        $region43: #{tpu_custom_call.1} parent=11 // pred_region
          _
        $region44: #{tpu_custom_call.1} parent=11 // pred_fallthru
          _
        // Predicated region
        $region45: #{tpu_custom_call.1} parent=11 // pred_check
          %p353 = pneg %p278
        $region46: #{tpu_custom_call.1} parent=11 // pred_check_branch
          %355 = sbr.rel (%p353) target = $region48
        $region47: #{tpu_custom_call.1} parent=11 // pred_region
          _
        $region48: #{tpu_custom_call.1} parent=11 // pred_fallthru
          _
      $region12: #{tpu_custom_call.1} parent=5 // pred_fallthru
        _
      %p356 = scmp.lt.s32.totalorder %s21, 2
      // Predicated region
      $region49: #{tpu_custom_call.1} parent=5 // pred_check
        %p357 = pneg %p356
      $region50: #{tpu_custom_call.1} parent=5 // pred_check_branch
        %359 = sbr.rel (%p357) target = $region52
      $region51: #{tpu_custom_call.1} parent=5 // pred_region
        // Predicated region
        $region53: #{tpu_custom_call.1} parent=51 // pred_check
          %p360 = pneg %p55
        $region54: #{tpu_custom_call.1} parent=51 // pred_check_branch
          %362 = sbr.rel (%p360) target = $region56
        $region55: #{tpu_custom_call.1} parent=51 // pred_region
          %s363 = smul.u32 2, %s29
          %p364 = scmp.lt.s32.totalorder %s28, 1
          %s365 = scalar_select %p364, %s28, 1
          %p366 = scmp.lt.s32.totalorder %s363, 1
          %s367 = scalar_select %p366, %s363, 1
          %s368 = smul.addr %s365, 2
          %s369 = sadd.s32 %s367, %s368
          %s370 = smul.addr %s369, 4
          %s371 = scalar_lea.vmem %s0, %s370
          %s372 = smul.u32 2, %s29
        $region56: #{tpu_custom_call.1} parent=51 // pred_fallthru
          _
        // Predicated region
        $region57: #{tpu_custom_call.1} parent=51 // pred_check
          %p373 = pneg %p83
        $region58: #{tpu_custom_call.1} parent=51 // pred_check_branch
          %375 = sbr.rel (%p373) target = $region60
        $region59: #{tpu_custom_call.1} parent=51 // pred_region
          %s376 = smul.u32 2, %s29
          %p377 = scmp.lt.s32.totalorder %s28, 1
          %s378 = scalar_select %p377, %s28, 1
          %p379 = scmp.lt.s32.totalorder %s376, 1
          %s380 = scalar_select %p379, %s376, 1
          %s381 = smul.addr %s378, 2
          %s382 = sadd.s32 %s380, %s381
          %s383 = smul.addr %s382, 8
          %s384 = scalar_lea.vmem %s1, %s383
          %s385 = smul.u32 2, %s29
        $region60: #{tpu_custom_call.1} parent=51 // pred_fallthru
          _
      $region52: #{tpu_custom_call.1} parent=5 // pred_fallthru
        _
      %p386 = scmp.le.s32.totalorder 1, %s21
      %p387 = scmp.lt.s32.totalorder %s21, 3
      %p388 = pnand %p386, %p387
      %p389 = pneg %p388
      // Predicated region
      $region61: #{tpu_custom_call.1} parent=5 // pred_check
        _
      $region62: #{tpu_custom_call.1} parent=5 // pred_check_branch
        %391 = sbr.rel (%p388) target = $region64
      $region63: #{tpu_custom_call.1} parent=5 // pred_region
        %s392 = ssub.s32 %s21, 1
        // Predicated region
        $region65: #{tpu_custom_call.1} parent=63 // pred_check
          %p393 = pneg %p236
        $region66: #{tpu_custom_call.1} parent=63 // pred_check_branch
          %395 = sbr.rel (%p393) target = $region68
        $region67: #{tpu_custom_call.1} parent=63 // pred_region
          %396 = dma.done [#allocation3], 4096
        $region68: #{tpu_custom_call.1} parent=63 // pred_fallthru
          _
        %s397 = smul.u32 2, %s31
        %p398 = scmp.lt.s32.totalorder %s30, 1
        %s399 = scalar_select %p398, %s30, 1
        %p400 = scmp.lt.s32.totalorder %s397, 1
        %s401 = scalar_select %p400, %s397, 1
        %s402 = smul.addr %s399, 2
        %s403 = sadd.s32 %s401, %s402
        %s404 = smul.addr %s403, 4
        %s405 = scalar_lea.vmem %s0, %s404
        %p406 = pneg %p61
        %p407 = pneg %p58
        %s408 = smul.u32 2, %s31
        %p409 = scmp.lt.s32.totalorder %s30, 1
        %s410 = scalar_select %p409, %s30, 1
        %p411 = scmp.lt.s32.totalorder %s408, 1
        %s412 = scalar_select %p411, %s408, 1
        %s413 = smul.addr %s410, 2
        %s414 = sadd.s32 %s412, %s413
        %s415 = smul.addr %s414, 8
        %s416 = scalar_lea.vmem %s1, %s415
        %p417 = pneg %p89
        %p418 = pneg %p86
        %p419 = pneg %p110
        %p420 = pneg %p107
        %p421 = pneg %p131
        %p422 = pneg %p128
        %p423 = pneg %p152
        %p424 = pneg %p149
        %p425 = pneg %p173
        %p426 = pneg %p170
        %p427 = pneg %p194
        %p428 = pneg %p191
        %p429 = pneg %p215
        %p430 = pneg %p212
        %p431 = pneg %p236
        %p432 = pneg %p233
        %p433 = pneg %p257
        %p434 = pneg %p254
        %p435 = pneg %p278
        %p436 = pneg %p275
        %p437 = pneg %p304
        %p438 = pneg %p301
        %s439 = sand.u32 %s291, 1
        %s440 = scalar_lea.sflag [#allocation4], %s439
        %s441 = sand.u32 %s291, 1
        %s442 = smul.addr %s441, 4
        %s443 = scalar_lea.vmem [#allocation5], %s442
        %s444 = smul.u32 2, %s31
        %p445 = scmp.lt.s32.totalorder %s30, 1
        %s446 = scalar_select %p445, %s30, 1
        %p447 = scmp.lt.s32.totalorder %s444, 1
        %s448 = scalar_select %p447, %s444, 1
        %s449 = smul.addr %s446, 2
        %s450 = sadd.s32 %s448, %s449
        %s451 = smul.addr %s450, 4
        %s452 = scalar_lea.vmem %s0, %s451
        %s453 = smul.u32 2, %s31
        %s454 = smul.u32 2, %s31
        %p455 = scmp.lt.s32.totalorder %s30, 1
        %s456 = scalar_select %p455, %s30, 1
        %p457 = scmp.lt.s32.totalorder %s454, 1
        %s458 = scalar_select %p457, %s454, 1
        %s459 = smul.addr %s456, 2
        %s460 = sadd.s32 %s458, %s459
        %s461 = smul.addr %s460, 8
        %s462 = scalar_lea.vmem %s1, %s461
        %s463 = smul.u32 2, %s31
        %v465 = vld [vmem:[%s452] sm:$0xf]
        %v466 = vld [vmem:[%s452 + $0x4] sm:$0xf]
        %v467 = vld [vmem:[%s2] sm:$0x3]
        %v468 = vld [vmem:[%s3] sm:$0x1]
        %v469 = vld [vmem:[%s4] sm:$0x1]
        %v472 = vunpack.c.l.b16 %v465
        %v473 = vunpack.c.l.b16 %v466
        %v474 = vpack.c.b16 %v473, %v472
        %vm475 = vcmask 23552
        %v477 = vsel %vm475, %v474, 0
        %vm479 = vcmask 1040384
        %vm480 = vcmask 1041408
        %v481 = vsel %vm479, 4294967295, 65535
        %v482 = vsel %vm480, %v481, 0
        %v484 = vand.u32 %v467, %v482
        %486 = vmatprep.subr.bf16.mxu0 0
        %487 = vmatpush1.bf16.msra.mxu0 %v484
        %488 = vmatprep.subr.bf16.mxu0 0
        %489 = vmatpush1.bf16.msra.mxu0 0
        %490 = vmatprep.subr.bf16.mxu0 0
        %491 = vmatpush1.bf16.msra.mxu0 0
        %492 = vmatprep.subr.bf16.mxu0 0
        %493 = vmatpush1.bf16.msra.mxu0 0
        %494 = vmatprep.subr.bf16.mxu0 0
        %495 = vmatpush1.bf16.msra.mxu0 0
        %496 = vmatprep.subr.bf16.mxu0 0
        %497 = vmatpush1.bf16.msra.mxu0 0
        %498 = vmatprep.subr.bf16.mxu0 0
        %499 = vmatpush1.bf16.msra.mxu0 0
        %500 = vmatprep.subr.bf16.mxu0 0
        %501 = vmatpush1.bf16.msra.mxu0 0
        %502 = vmatprep.subr.bf16.mxu0 0
        %503 = vmatpush1.bf16.msra.mxu0 0
        %504 = vmatprep.subr.bf16.mxu0 0
        %505 = vmatpush1.bf16.msra.mxu0 0
        %506 = vmatprep.subr.bf16.mxu0 0
        %507 = vmatpush1.bf16.msra.mxu0 0
        %508 = vmatprep.subr.bf16.mxu0 0
        %509 = vmatpush1.bf16.msra.mxu0 0
        %510 = vmatprep.subr.bf16.mxu0 0
        %511 = vmatpush1.bf16.msra.mxu0 0
        %512 = vmatprep.subr.bf16.mxu0 0
        %513 = vmatpush1.bf16.msra.mxu0 0
        %514 = vmatprep.subr.bf16.mxu0 0
        %515 = vmatpush1.bf16.msra.mxu0 0
        %516 = vmatprep.subr.bf16.mxu0 0
        %517 = vmatpush1.bf16.msra.mxu0 0
        %518 = vmatprep.mubr.bf16.mxu0 0
        %519 = vmatmul.mubr.bf16.gmra.mrb[0].mxu0 %v477
        %v520 = vpop.f32.mrb[0].mxu0
        %v521 = vadd.f32 0.0, %v520
        %v522 = vpop.f32.mrb[0].mxu0
        %v523 = vpop.f32.mrb[0].mxu0
        %v524 = vadd.f32 0.0, %v523
        %v525 = vpop.f32.mrb[0].mxu0
        %526 = vdwg.mxu0
        %v528 = vlaneseq
        %v529 = vshrl.u32 %v528, 7
        %v530 = vsub.s32 0, %v529
        %v531 = vrot.slane %v468, %v530
        %v533 = vmul.f32 %v521, %v531
        %v534 = vmul.f32 %v524, %v531
        %v536 = vlaneseq
        %v537 = vshrl.u32 %v536, 7
        %v538 = vsub.s32 0, %v537
        %v539 = vrot.slane %v469, %v538
        %v541 = vadd.f32 %v533, %v539
        %v542 = vadd.f32 %v534, %v539
        %v543 = vmax.f32 %v541, 0.0
        %v544 = vmax.f32 %v542, 0.0
        %v545 = vpack.c.bf16 %v544, %v543
        %v546 = vld [vmem:[%s5] sm:$0xf]
        %v547 = vld [vmem:[%s5 + $0x4] sm:$0xf]
        %v548 = vld [vmem:[%s5 + $0x8] sm:$0xf]
        %v549 = vld [vmem:[%s5 + $0xc] sm:$0xf]
        %v550 = vld [vmem:[%s5 + $0x10] sm:$0xf]
        %v551 = vld [vmem:[%s5 + $0x14] sm:$0xf]
        %v552 = vld [vmem:[%s5 + $0x18] sm:$0xf]
        %v553 = vld [vmem:[%s5 + $0x1c] sm:$0xf]
        %v554 = vld [vmem:[%s6] sm:$0x1]
        %v555 = vld [vmem:[%s7] sm:$0x1]
        %v564 = vunpack.c.l.b16 %v546
        %v565 = vunpack.c.l.b16 %v547
        %v566 = vunpack.c.l.b16 %v548
        %v567 = vunpack.c.l.b16 %v549
        %v568 = vunpack.c.l.b16 %v550
        %v569 = vunpack.c.l.b16 %v551
        %v570 = vunpack.c.l.b16 %v552
        %v571 = vunpack.c.l.b16 %v553
        %v572 = vpack.c.b16 %v565, %v564
        %v573 = vpack.c.b16 %v567, %v566
        %v574 = vpack.c.b16 %v569, %v568
        %v575 = vpack.c.b16 %v571, %v570
        %vm580 = vcmask 523264
        %v582 = vsel %vm580, %v545, 0
        %584 = vmatprep.subr.bf16.mxu0 0
        %585 = vmatpush1.bf16.msra.mxu0 %v572
        %586 = vmatprep.subr.bf16.mxu0 0
        %587 = vmatpush1.bf16.msra.mxu0 %v573
        %588 = vmatprep.subr.bf16.mxu0 0
        %589 = vmatpush1.bf16.msra.mxu0 %v574
        %590 = vmatprep.subr.bf16.mxu0 0
        %591 = vmatpush1.bf16.msra.mxu0 %v575
        %592 = vmatprep.subr.bf16.mxu0 0
        %593 = vmatpush1.bf16.msra.mxu0 0
        %594 = vmatprep.subr.bf16.mxu0 0
        %595 = vmatpush1.bf16.msra.mxu0 0
        %596 = vmatprep.subr.bf16.mxu0 0
        %597 = vmatpush1.bf16.msra.mxu0 0
        %598 = vmatprep.subr.bf16.mxu0 0
        %599 = vmatpush1.bf16.msra.mxu0 0
        %600 = vmatprep.subr.bf16.mxu0 0
        %601 = vmatpush1.bf16.msra.mxu0 0
        %602 = vmatprep.subr.bf16.mxu0 0
        %603 = vmatpush1.bf16.msra.mxu0 0
        %604 = vmatprep.subr.bf16.mxu0 0
        %605 = vmatpush1.bf16.msra.mxu0 0
        %606 = vmatprep.subr.bf16.mxu0 0
        %607 = vmatpush1.bf16.msra.mxu0 0
        %608 = vmatprep.subr.bf16.mxu0 0
        %609 = vmatpush1.bf16.msra.mxu0 0
        %610 = vmatprep.subr.bf16.mxu0 0
        %611 = vmatpush1.bf16.msra.mxu0 0
        %612 = vmatprep.subr.bf16.mxu0 0
        %613 = vmatpush1.bf16.msra.mxu0 0
        %614 = vmatprep.subr.bf16.mxu0 0
        %615 = vmatpush1.bf16.msra.mxu0 0
        %616 = vmatprep.mubr.bf16.mxu0 0
        %617 = vmatmul.mubr.bf16.gmra.mrb[0].mxu0 %v582
        %v618 = vpop.f32.mrb[0].mxu0
        %v619 = vadd.f32 0.0, %v618
        %v620 = vpop.f32.mrb[0].mxu0
        %v621 = vpop.f32.mrb[0].mxu0
        %v622 = vadd.f32 0.0, %v621
        %v623 = vpop.f32.mrb[0].mxu0
        %624 = vdwg.mxu0
        %v626 = vlaneseq
        %v627 = vshrl.u32 %v626, 7
        %v628 = vsub.s32 0, %v627
        %v629 = vrot.slane %v554, %v628
        %v631 = vmul.f32 %v619, %v629
        %v632 = vmul.f32 %v622, %v629
        %v634 = vlaneseq
        %v635 = vshrl.u32 %v634, 7
        %v636 = vsub.s32 0, %v635
        %v637 = vrot.slane %v555, %v636
        %v639 = vadd.f32 %v631, %v637
        %v640 = vadd.f32 %v632, %v637
        %v641 = vmax.f32 %v639, 0.0
        %v642 = vmax.f32 %v640, 0.0
        %v643 = vpack.c.bf16 %v642, %v641
        %v644 = vld [vmem:[#allocation2] sm:$0xff]
        %v645 = vld [vmem:[#allocation2 + $0x8] sm:$0xff]
        %v646 = vld [vmem:[#allocation2 + $0x10] sm:$0xff]
        %v647 = vld [vmem:[#allocation2 + $0x18] sm:$0xff]
        %v648 = vld [vmem:[#allocation2 + $0x20] sm:$0xff]
        %v649 = vld [vmem:[#allocation2 + $0x28] sm:$0xff]
        %v650 = vld [vmem:[#allocation2 + $0x30] sm:$0xff]
        %v651 = vld [vmem:[#allocation2 + $0x38] sm:$0xff]
        %v652 = vld [vmem:[#allocation2 + $0x40] sm:$0xff]
        %v653 = vld [vmem:[#allocation2 + $0x48] sm:$0xff]
        %v654 = vld [vmem:[#allocation2 + $0x50] sm:$0xff]
        %v655 = vld [vmem:[#allocation2 + $0x58] sm:$0xff]
        %v656 = vld [vmem:[#allocation2 + $0x60] sm:$0xff]
        %v657 = vld [vmem:[#allocation2 + $0x68] sm:$0xff]
        %v658 = vld [vmem:[#allocation2 + $0x70] sm:$0xff]
        %v659 = vld [vmem:[#allocation2 + $0x78] sm:$0xff]
        %v660 = vld [vmem:[#allocation2 + $0x80] sm:$0xff]
        %v661 = vld [vmem:[#allocation2 + $0x88] sm:$0xff]
        %v662 = vld [vmem:[#allocation2 + $0x90] sm:$0xff]
        %v663 = vld [vmem:[#allocation2 + $0x98] sm:$0xff]
        %v664 = vld [vmem:[#allocation2 + $0xa0] sm:$0xff]
        %v665 = vld [vmem:[#allocation2 + $0xa8] sm:$0xff]
        %v666 = vld [vmem:[#allocation2 + $0xb0] sm:$0xff]
        %v667 = vld [vmem:[#allocation2 + $0xb8] sm:$0xff]
        %v668 = vld [vmem:[#allocation2 + $0xc0] sm:$0xff]
        %v669 = vld [vmem:[#allocation2 + $0xc8] sm:$0xff]
        %v670 = vld [vmem:[#allocation2 + $0xd0] sm:$0xff]
        %v671 = vld [vmem:[#allocation2 + $0xd8] sm:$0xff]
        %v672 = vld [vmem:[#allocation2 + $0xe0] sm:$0xff]
        %v673 = vld [vmem:[#allocation2 + $0xe8] sm:$0xff]
        %v674 = vld [vmem:[#allocation2 + $0xf0] sm:$0xff]
        %v675 = vld [vmem:[#allocation2 + $0xf8] sm:$0xff]
        %v676 = vld [vmem:[%s9] sm:$0xf]
        %v677 = vld [vmem:[%s10] sm:$0xf]
        %v710 = vunpack.c.l.b16 %v644
        %v711 = vunpack.c.h.b16 %v644
        %v712 = vunpack.c.l.b16 %v645
        %v713 = vunpack.c.h.b16 %v645
        %v714 = vunpack.c.l.b16 %v646
        %v715 = vunpack.c.h.b16 %v646
        %v716 = vunpack.c.l.b16 %v647
        %v717 = vunpack.c.h.b16 %v647
        %v718 = vunpack.c.l.b16 %v648
        %v719 = vunpack.c.h.b16 %v648
        %v720 = vunpack.c.l.b16 %v649
        %v721 = vunpack.c.h.b16 %v649
        %v722 = vunpack.c.l.b16 %v650
        %v723 = vunpack.c.h.b16 %v650
        %v724 = vunpack.c.l.b16 %v651
        %v725 = vunpack.c.h.b16 %v651
        %v726 = vunpack.c.l.b16 %v652
        %v727 = vunpack.c.h.b16 %v652
        %v728 = vunpack.c.l.b16 %v653
        %v729 = vunpack.c.h.b16 %v653
        %v730 = vunpack.c.l.b16 %v654
        %v731 = vunpack.c.h.b16 %v654
        %v732 = vunpack.c.l.b16 %v655
        %v733 = vunpack.c.h.b16 %v655
        %v734 = vunpack.c.l.b16 %v656
        %v735 = vunpack.c.h.b16 %v656
        %v736 = vunpack.c.l.b16 %v657
        %v737 = vunpack.c.h.b16 %v657
        %v738 = vunpack.c.l.b16 %v658
        %v739 = vunpack.c.h.b16 %v658
        %v740 = vunpack.c.l.b16 %v659
        %v741 = vunpack.c.h.b16 %v659
        %v742 = vunpack.c.l.b16 %v660
        %v743 = vunpack.c.h.b16 %v660
        %v744 = vunpack.c.l.b16 %v661
        %v745 = vunpack.c.h.b16 %v661
        %v746 = vunpack.c.l.b16 %v662
        %v747 = vunpack.c.h.b16 %v662
        %v748 = vunpack.c.l.b16 %v663
        %v749 = vunpack.c.h.b16 %v663
        %v750 = vunpack.c.l.b16 %v664
        %v751 = vunpack.c.h.b16 %v664
        %v752 = vunpack.c.l.b16 %v665
        %v753 = vunpack.c.h.b16 %v665
        %v754 = vunpack.c.l.b16 %v666
        %v755 = vunpack.c.h.b16 %v666
        %v756 = vunpack.c.l.b16 %v667
        %v757 = vunpack.c.h.b16 %v667
        %v758 = vunpack.c.l.b16 %v668
        %v759 = vunpack.c.h.b16 %v668
        %v760 = vunpack.c.l.b16 %v669
        %v761 = vunpack.c.h.b16 %v669
        %v762 = vunpack.c.l.b16 %v670
        %v763 = vunpack.c.h.b16 %v670
        %v764 = vunpack.c.l.b16 %v671
        %v765 = vunpack.c.h.b16 %v671
        %v766 = vunpack.c.l.b16 %v672
        %v767 = vunpack.c.h.b16 %v672
        %v768 = vunpack.c.l.b16 %v673
        %v769 = vunpack.c.h.b16 %v673
        %v770 = vunpack.c.l.b16 %v674
        %v771 = vunpack.c.h.b16 %v674
        %v772 = vunpack.c.l.b16 %v675
        %v773 = vunpack.c.h.b16 %v675
        %v774 = vpack.c.b16 %v714, %v710
        %v775 = vpack.c.b16 %v715, %v711
        %v776 = vpack.c.b16 %v716, %v712
        %v777 = vpack.c.b16 %v717, %v713
        %v778 = vpack.c.b16 %v722, %v718
        %v779 = vpack.c.b16 %v723, %v719
        %v780 = vpack.c.b16 %v724, %v720
        %v781 = vpack.c.b16 %v725, %v721
        %v782 = vpack.c.b16 %v730, %v726
        %v783 = vpack.c.b16 %v731, %v727
        %v784 = vpack.c.b16 %v732, %v728
        %v785 = vpack.c.b16 %v733, %v729
        %v786 = vpack.c.b16 %v738, %v734
        %v787 = vpack.c.b16 %v739, %v735
        %v788 = vpack.c.b16 %v740, %v736
        %v789 = vpack.c.b16 %v741, %v737
        %v790 = vpack.c.b16 %v746, %v742
        %v791 = vpack.c.b16 %v747, %v743
        %v792 = vpack.c.b16 %v748, %v744
        %v793 = vpack.c.b16 %v749, %v745
        %v794 = vpack.c.b16 %v754, %v750
        %v795 = vpack.c.b16 %v755, %v751
        %v796 = vpack.c.b16 %v756, %v752
        %v797 = vpack.c.b16 %v757, %v753
        %v798 = vpack.c.b16 %v762, %v758
        %v799 = vpack.c.b16 %v763, %v759
        %v800 = vpack.c.b16 %v764, %v760
        %v801 = vpack.c.b16 %v765, %v761
        %v802 = vpack.c.b16 %v770, %v766
        %v803 = vpack.c.b16 %v771, %v767
        %v804 = vpack.c.b16 %v772, %v768
        %v805 = vpack.c.b16 %v773, %v769
        %838 = vmatprep.subr.bf16.mxu0 %v775
        %839 = vmatpush1.bf16.msra.mxu0 %v774
        %840 = vmatprep.subr.bf16.mxu0 %v779
        %841 = vmatpush1.bf16.msra.mxu0 %v778
        %842 = vmatprep.subr.bf16.mxu0 %v783
        %843 = vmatpush1.bf16.msra.mxu0 %v782
        %844 = vmatprep.subr.bf16.mxu0 %v787
        %845 = vmatpush1.bf16.msra.mxu0 %v786
        %846 = vmatprep.subr.bf16.mxu0 %v791
        %847 = vmatpush1.bf16.msra.mxu0 %v790
        %848 = vmatprep.subr.bf16.mxu0 %v795
        %849 = vmatpush1.bf16.msra.mxu0 %v794
        %850 = vmatprep.subr.bf16.mxu0 %v799
        %851 = vmatpush1.bf16.msra.mxu0 %v798
        %852 = vmatprep.subr.bf16.mxu0 %v803
        %853 = vmatpush1.bf16.msra.mxu0 %v802
        %854 = vmatprep.subr.bf16.mxu0 0
        %855 = vmatpush1.bf16.msra.mxu0 0
        %856 = vmatprep.subr.bf16.mxu0 0
        %857 = vmatpush1.bf16.msra.mxu0 0
        %858 = vmatprep.subr.bf16.mxu0 0
        %859 = vmatpush1.bf16.msra.mxu0 0
        %860 = vmatprep.subr.bf16.mxu0 0
        %861 = vmatpush1.bf16.msra.mxu0 0
        %862 = vmatprep.subr.bf16.mxu0 0
        %863 = vmatpush1.bf16.msra.mxu0 0
        %864 = vmatprep.subr.bf16.mxu0 0
        %865 = vmatpush1.bf16.msra.mxu0 0
        %866 = vmatprep.subr.bf16.mxu0 0
        %867 = vmatpush1.bf16.msra.mxu0 0
        %868 = vmatprep.subr.bf16.mxu0 0
        %869 = vmatpush1.bf16.msra.mxu0 0
        %870 = vmatprep.mubr.bf16.mxu0 0
        %871 = vmatmul.mubr.bf16.gmra.mrb[0].mxu0 %v643
        %v872 = vpop.f32.mrb[0].mxu0
        %v873 = vadd.f32 0.0, %v872
        %v874 = vpop.f32.mrb[0].mxu0
        %v875 = vadd.f32 0.0, %v874
        %v876 = vpop.f32.mrb[0].mxu0
        %v877 = vadd.f32 0.0, %v876
        %v878 = vpop.f32.mrb[0].mxu0
        %v879 = vadd.f32 0.0, %v878
        %880 = vdwg.mxu0
        %881 = vmatprep.subr.bf16.mxu0 %v777
        %882 = vmatpush1.bf16.msra.mxu0 %v776
        %883 = vmatprep.subr.bf16.mxu0 %v781
        %884 = vmatpush1.bf16.msra.mxu0 %v780
        %885 = vmatprep.subr.bf16.mxu0 %v785
        %886 = vmatpush1.bf16.msra.mxu0 %v784
        %887 = vmatprep.subr.bf16.mxu0 %v789
        %888 = vmatpush1.bf16.msra.mxu0 %v788
        %889 = vmatprep.subr.bf16.mxu0 %v793
        %890 = vmatpush1.bf16.msra.mxu0 %v792
        %891 = vmatprep.subr.bf16.mxu0 %v797
        %892 = vmatpush1.bf16.msra.mxu0 %v796
        %893 = vmatprep.subr.bf16.mxu0 %v801
        %894 = vmatpush1.bf16.msra.mxu0 %v800
        %895 = vmatprep.subr.bf16.mxu0 %v805
        %896 = vmatpush1.bf16.msra.mxu0 %v804
        %897 = vmatprep.subr.bf16.mxu0 0
        %898 = vmatpush1.bf16.msra.mxu0 0
        %899 = vmatprep.subr.bf16.mxu0 0
        %900 = vmatpush1.bf16.msra.mxu0 0
        %901 = vmatprep.subr.bf16.mxu0 0
        %902 = vmatpush1.bf16.msra.mxu0 0
        %903 = vmatprep.subr.bf16.mxu0 0
        %904 = vmatpush1.bf16.msra.mxu0 0
        %905 = vmatprep.subr.bf16.mxu0 0
        %906 = vmatpush1.bf16.msra.mxu0 0
        %907 = vmatprep.subr.bf16.mxu0 0
        %908 = vmatpush1.bf16.msra.mxu0 0
        %909 = vmatprep.subr.bf16.mxu0 0
        %910 = vmatpush1.bf16.msra.mxu0 0
        %911 = vmatprep.subr.bf16.mxu0 0
        %912 = vmatpush1.bf16.msra.mxu0 0
        %913 = vmatprep.mubr.bf16.mxu0 0
        %914 = vmatmul.mubr.bf16.gmra.mrb[0].mxu0 %v643
        %v915 = vpop.f32.mrb[0].mxu0
        %v916 = vadd.f32 0.0, %v915
        %v917 = vpop.f32.mrb[0].mxu0
        %v918 = vadd.f32 0.0, %v917
        %v919 = vpop.f32.mrb[0].mxu0
        %v920 = vadd.f32 0.0, %v919
        %v921 = vpop.f32.mrb[0].mxu0
        %v922 = vadd.f32 0.0, %v921
        %923 = vdwg.mxu0
        %v925 = vlaneseq
        %v926 = vshrl.u32 %v925, 7
        %v927 = vsub.s32 0, %v926
        %v928 = vrot.slane %v676, %v927
        %v929 = vlaneseq
        %v930 = vshrl.u32 %v929, 7
        %v931 = vsub.s32 1, %v930
        %v932 = vrot.slane %v676, %v931
        %v933 = vlaneseq
        %v934 = vshrl.u32 %v933, 7
        %v935 = vsub.s32 2, %v934
        %v936 = vrot.slane %v676, %v935
        %v937 = vlaneseq
        %v938 = vshrl.u32 %v937, 7
        %v939 = vsub.s32 3, %v938
        %v940 = vrot.slane %v676, %v939
        %v945 = vmul.f32 %v873, %v928
        %v946 = vmul.f32 %v875, %v932
        %v947 = vmul.f32 %v916, %v936
        %v948 = vmul.f32 %v918, %v940
        %v949 = vmul.f32 %v877, %v928
        %v950 = vmul.f32 %v879, %v932
        %v951 = vmul.f32 %v920, %v936
        %v952 = vmul.f32 %v922, %v940
        %v954 = vlaneseq
        %v955 = vshrl.u32 %v954, 7
        %v956 = vsub.s32 0, %v955
        %v957 = vrot.slane %v677, %v956
        %v958 = vlaneseq
        %v959 = vshrl.u32 %v958, 7
        %v960 = vsub.s32 1, %v959
        %v961 = vrot.slane %v677, %v960
        %v962 = vlaneseq
        %v963 = vshrl.u32 %v962, 7
        %v964 = vsub.s32 2, %v963
        %v965 = vrot.slane %v677, %v964
        %v966 = vlaneseq
        %v967 = vshrl.u32 %v966, 7
        %v968 = vsub.s32 3, %v967
        %v969 = vrot.slane %v677, %v968
        %v974 = vadd.f32 %v945, %v957
        %v975 = vadd.f32 %v946, %v961
        %v976 = vadd.f32 %v947, %v965
        %v977 = vadd.f32 %v948, %v969
        %v978 = vadd.f32 %v949, %v957
        %v979 = vadd.f32 %v950, %v961
        %v980 = vadd.f32 %v951, %v965
        %v981 = vadd.f32 %v952, %v969
        %v982 = vmax.f32 %v974, 0.0
        %v983 = vmax.f32 %v975, 0.0
        %v984 = vmax.f32 %v976, 0.0
        %v985 = vmax.f32 %v977, 0.0
        %v986 = vmax.f32 %v978, 0.0
        %v987 = vmax.f32 %v979, 0.0
        %v988 = vmax.f32 %v980, 0.0
        %v989 = vmax.f32 %v981, 0.0
        %v990 = vld [vmem:[%s462] sm:$0xff]
        %v991 = vld [vmem:[%s462 + $0x8] sm:$0xff]
        %vm992 = vcmp.gt.f32.partialorder %v990, 0.5
        %vm993 = vcmp.gt.f32.partialorder %v991, 0.5
        %v994 = vsel %vm992, 1, 0
        %v995 = vsel %vm993, 1, 0
        %996 = vset.pattern.permute.xlu0 0
        %997 = vperm.xlu0 %996, %v994
        %v998 = vpop.permute.xlu0 %997
        %999 = vset.pattern.permute.xlu0 0
        %1000 = vperm.xlu0 %999, %v995
        %v1001 = vpop.permute.xlu0 %1000
        %vm1002 = vcmp.eq.s32.totalorder %v998, 1
        %vm1003 = vcmp.eq.s32.totalorder %v1001, 1
        %v1004 = vsel %vm1002, %v982, -3e+38
        %v1005 = vsel %vm1002, %v983, -3e+38
        %v1006 = vsel %vm1002, %v984, -3e+38
        %v1007 = vsel %vm1002, %v985, -3e+38
        %v1008 = vsel %vm1003, %v986, -3e+38
        %v1009 = vsel %vm1003, %v987, -3e+38
        %v1010 = vsel %vm1003, %v988, -3e+38
        %v1011 = vsel %vm1003, %v989, -3e+38
        %v1012 = vmax.f32 %v1004, %v1008
        %v1013 = vrot.slane %v1012, 4
        %v1014 = vmax.f32 %v1012, %v1013
        %v1015 = vrot.slane %v1014, 2
        %v1016 = vmax.f32 %v1014, %v1015
        %v1017 = vrot.slane %v1016, 1
        %v1018 = vmax.f32 %v1016, %v1017
        %v1019 = vmax.f32 %v1005, %v1009
        %v1020 = vrot.slane %v1019, 4
        %v1021 = vmax.f32 %v1019, %v1020
        %v1022 = vrot.slane %v1021, 2
        %v1023 = vmax.f32 %v1021, %v1022
        %v1024 = vrot.slane %v1023, 1
        %v1025 = vmax.f32 %v1023, %v1024
        %v1026 = vmax.f32 %v1006, %v1010
        %v1027 = vrot.slane %v1026, 4
        %v1028 = vmax.f32 %v1026, %v1027
        %v1029 = vrot.slane %v1028, 2
        %v1030 = vmax.f32 %v1028, %v1029
        %v1031 = vrot.slane %v1030, 1
        %v1032 = vmax.f32 %v1030, %v1031
        %v1033 = vmax.f32 %v1007, %v1011
        %v1034 = vrot.slane %v1033, 4
        %v1035 = vmax.f32 %v1033, %v1034
        %v1036 = vrot.slane %v1035, 2
        %v1037 = vmax.f32 %v1035, %v1036
        %v1038 = vrot.slane %v1037, 1
        %v1039 = vmax.f32 %v1037, %v1038
        %p1040 = scmp.eq.s32.totalorder %s31, 0
        // Predicated region
        $region69: #{tpu_custom_call.1} parent=63 // pred_check
          %p1041 = pneg %p1040
        $region70: #{tpu_custom_call.1} parent=63 // pred_check_branch
          %1043 = sbr.rel (%p1041) target = $region72
        $region71: #{tpu_custom_call.1} parent=63 // pred_region
          %v1044 = vlaneseq
          %vm1045 = vcmp.ge.s32.totalorder %v1044, 0
          %vm1046 = vcmp.lt.s32.totalorder %v1044, 512
          %vm1047 = vmand %vm1045, %vm1046
          %1048 = vst.msk [vmem:[%s443] sm:$0xf] %vm1047, -3e+38
        $region72: #{tpu_custom_call.1} parent=63 // pred_fallthru
          _
        %v1049 = vld [vmem:[%s443] sm:$0xf]
        %v1054 = vcombine.low %v1018, %v1025
        %v1055 = vcombine.low %v1032, %v1039
        %v1057 = vunpack.c.l.s4 1966171168
        %v1058 = vunpack.c.0.s8 %v1057
        %v1059 = vlaneseq
        %v1060 = vshrl.u32 %v1059, 7
        %v1061 = vsub.s32 %v1058, %v1060
        %v1062 = vrot.slane %v1054, %v1061
        %v1064 = vunpack.c.l.s4 1966171168
        %v1065 = vunpack.c.0.s8 %v1064
        %v1066 = vlaneseq
        %v1067 = vshrl.u32 %v1066, 7
        %v1068 = vsub.s32 %v1065, %v1067
        %v1069 = vrot.slane %v1055, %v1068
        %v1070 = vcombine.low %v1062, %v1069
        %v1072 = vunpack.c.l.s4 1966171168
        %v1073 = vunpack.c.0.s8 %v1072
        %v1074 = vlaneseq
        %v1075 = vshrl.u32 %v1074, 7
        %v1076 = vsub.s32 %v1073, %v1075
        %v1077 = vrot.slane %v1070, %v1076
        %v1079 = vmax.f32 %v1049, %v1077
        %v1080 = vlaneseq
        %vm1081 = vcmp.ge.s32.totalorder %v1080, 0
        %vm1082 = vcmp.lt.s32.totalorder %v1080, 512
        %vm1083 = vmand %vm1081, %vm1082
        %1084 = vst.msk [vmem:[%s443] sm:$0xf] %vm1083, %v1079
        %s1085 = sand.u32 %s291, 1
        %s1086 = scalar_lea.sflag [#allocation4], %s1085
        %s1087 = sand.u32 %s291, 1
        %s1088 = smul.addr %s1087, 4
        %s1089 = scalar_lea.vmem [#allocation5], %s1088
        // Predicated region
        $region73: #{tpu_custom_call.1} parent=63 // pred_check
          %p1090 = pneg %p301
        $region74: #{tpu_custom_call.1} parent=63 // pred_check_branch
          %1092 = sbr.rel (%p1090) target = $region76
        $region75: #{tpu_custom_call.1} parent=63 // pred_region
          %s1094 = ssub.s32 64, 64
          %1095 = vsyncadd %s1086, %s1094
          %s1096 = smul.addr %s30, 4
          %s1097 = smul.addr %s1096, 16
          %s1098 = scalar_lea.hbm %s11, %s1097
          %s1100 = sshll.u32 %s1089, 4
          %s1101 = int_to_ptr.vmem [resolvable:$true] %s1100
          %1103 = dma.vmem_to_hbm [thread:$0]  %s1101, 64, %s1098, %s1086
        $region76: #{tpu_custom_call.1} parent=63 // pred_fallthru
          _
      $region64: #{tpu_custom_call.1} parent=5 // pred_fallthru
        _
      %p1104 = scmp.le.s32.totalorder 2, %s21
      // Predicated region
      $region77: #{tpu_custom_call.1} parent=5 // pred_check
        %p1105 = pneg %p1104
      $region78: #{tpu_custom_call.1} parent=5 // pred_check_branch
        %1107 = sbr.rel (%p1105) target = $region80
      $region79: #{tpu_custom_call.1} parent=5 // pred_region
        %s1108 = ssub.s32 %s21, 2
        // Predicated region
        $region81: #{tpu_custom_call.1} parent=79 // pred_check
          %p1109 = pneg %p307
        $region82: #{tpu_custom_call.1} parent=79 // pred_check_branch
          %1111 = sbr.rel (%p1109) target = $region84
        $region83: #{tpu_custom_call.1} parent=79 // pred_region
          %s1112 = sand.u32 %s292, 1
          %s1113 = scalar_lea.sflag [#allocation4], %s1112
          %s1114 = sand.u32 %s292, 1
          %s1115 = smul.addr %s1114, 4
          %s1116 = scalar_lea.vmem [#allocation5], %s1115
          %1117 = dma.done %s1113, 64
        $region84: #{tpu_custom_call.1} parent=79 // pred_fallthru
          _
      $region80: #{tpu_custom_call.1} parent=5 // pred_fallthru
        _
    $region6: #{tpu_custom_call.1} parent=1 // loop_footer
      %s25 = sadd.s32 1, %s21
    $region7: #{tpu_custom_call.1} parent=1 // loop_footer_branch
      %20 = sbr.rel target = $region3
    $region8: #{tpu_custom_call.1} parent=1 // loop_exit
      _
    %1118 = vsyncpa [#allocation3], 1
    %s1119 = scalar_lea.sflag [#allocation3], 1
    %1120 = vsyncpa %s1119, 1
    %1121 = vsyncpa [#allocation4], 1
    %s1122 = scalar_lea.sflag [#allocation4], 1
    %1123 = vsyncpa %s1122, 1

</llo_original>
